<compile_context>
chip_gen: v7x
topology: tpu7x:2x2x1
jax: 0.10.0
libtpu: 0.0.40
codegen_flags: <defaults>
</compile_context>

<pallas_src>
import functools

import jax
import jax.numpy as jnp
from jax.experimental import pallas as pl
from jax.experimental.pallas import tpu as pltpu


# ---------------------------------------------------------------------------
# Kernel
# ---------------------------------------------------------------------------
def _lane_mod(x, m):
    """x % m for a non-negative int32 iota; bitwise AND when m is a power of 2."""
    if m & (m - 1) == 0:
        return jnp.bitwise_and(x, m - 1)
    return jax.lax.rem(x, m)   # general path (vector int rem)


def _gaussian_pair_kernel(m2f_ref, f2m_ref, w_ref, b_ref, out_ref,
                          xpad_ref, patch_ref, *, width):
    """Both Gaussian blocks (4 fused 3x3 convs), all images, one MXU matmul.

    m2f_ref, f2m_ref : (N, Cin, P)      inputs, P = H*W on lanes
    w_ref            : (8, 9*2*Cin)     block-diagonal im2col weights
                       rows 0:2 mu_fwd, 2:4 lv_fwd, 4:6 mu_rev, 6:8 lv_rev
                       cols r = tap*2*Cin + block*Cin + cin
    b_ref            : (8, 1)           fused bias
    out_ref          : (8, N*P)         fused lane-dense output
    xpad_ref         : (2*Cin, pad + N*P + pad)  staging buffer, aligned halo
    patch_ref        : (9*2*Cin, N*P)   im2col patch matrix scratch
    """
    n_batch, cin, p = m2f_ref.shape
    npx = n_batch * p
    c2 = 2 * cin
    pad = (xpad_ref.shape[1] - npx) // 2            # 128-aligned halo width

    # ---- stage both blocks into one lane-dense (2*Cin, N*P) buffer --------
    # Zero only the two halo strips (aligned, unmasked stores).
    strip = jnp.zeros((c2, pad), xpad_ref.dtype)
    xpad_ref[:, 0:pad] = strip
    xpad_ref[:, pad + npx:pad + npx + pad] = strip
    for n in range(n_batch):                        # tiny static batch, unrolled
        base = pad + n * p                          # aligned lane offset
        xpad_ref[0:cin, base:base + p] = m2f_ref[n]
        xpad_ref[cin:c2, base:base + p] = f2m_ref[n]

    # ---- border-validity masks from a lane iota (no DMA'd mask input) -----
    lane = jax.lax.broadcasted_iota(jnp.int32, (c2, npx), 1)
    pos = _lane_mod(lane, p)                        # pixel index within its image
    col = _lane_mod(lane, width)                    # column within its row
    h_up = pos >= width                             # row above exists   (dh = -1)
    h_dn = pos < p - width                          # row below exists   (dh = +1)
    w_lf = col >= 1                                 # column left exists (dw = -1)
    w_rt = col <= width - 2                         # column right exists(dw = +1)

    # ---- im2col: 9 shifted taps -> sublane-aligned rows of patch scratch --
    tap = 0
    for kh in range(3):
        for kw in range(3):
            dh, dw = kh - 1, kw - 1
            d = dh * width + dw                     # flattened H*W shift
            win = xpad_ref[:, pad + d:pad + d + npx]          # (2*Cin, N*P)
            mask = None
            if dh == -1:
                mask = h_up
            elif dh == 1:
                mask = h_dn
            if dw == -1:
                mask = w_lf if mask is None else jnp.logical_and(mask, w_lf)
            elif dw == 1:
                mask = w_rt if mask is None else jnp.logical_and(mask, w_rt)
            if mask is not None:
                win = jnp.where(mask, win, 0.0)
            patch_ref[tap * c2:(tap + 1) * c2, :] = win
            tap += 1

    # ---- one block-diagonal MXU matmul for both blocks, all images --------
    out = jnp.dot(w_ref[...], patch_ref[...],
                  preferred_element_type=jnp.float32) + b_ref[...]
    out_ref[...] = out.astype(out_ref.dtype)


# ---------------------------------------------------------------------------
# Wrapper around pallas_call
# ---------------------------------------------------------------------------
def _gaussian_pair(m2f_flat, f2m_flat, w_bd, b_bd, width):
    n_batch, cin, p = m2f_flat.shape
    npx = n_batch * p
    ct = w_bd.shape[0]                               # 8 fused output rows
    kdim = w_bd.shape[1]                             # 9 * 2 * Cin = 144
    pad = ((width + 1 + 127) // 128) * 128           # aligned halo >= max tap shift

    kernel = functools.partial(_gaussian_pair_kernel, width=width)
    return pl.pallas_call(
        kernel,
        out_shape=jax.ShapeDtypeStruct((ct, npx), jnp.float32),
        grid_spec=pltpu.PrefetchScalarGridSpec(
            num_scalar_prefetch=0,
            grid=(1,),                               # single step: everything fused
            in_specs=[
                pl.BlockSpec((n_batch, cin, p), lambda i: (0, 0, 0)),
                pl.BlockSpec((n_batch, cin, p), lambda i: (0, 0, 0)),
                pl.BlockSpec((ct, kdim), lambda i: (0, 0)),
                pl.BlockSpec((ct, 1), lambda i: (0, 0)),
            ],
            out_specs=pl.BlockSpec((ct, npx), lambda i: (0, 0)),
            scratch_shapes=[
                pltpu.VMEM((2 * cin, pad + npx + pad), jnp.float32),  # staging + halo
                pltpu.VMEM((9 * 2 * cin, npx), jnp.float32),          # im2col patches
            ],
        ),
        compiler_params=pltpu.CompilerParams(
            dimension_semantics=("arbitrary",),
        ),
    )(m2f_flat, f2m_flat, w_bd, b_bd)


# ---------------------------------------------------------------------------
# Parameters (synthetic, PyTorch-like uniform fan-in init) + fused block-diag
# ---------------------------------------------------------------------------
def _init_conv_params(key, c_in=8, c_out=2, k=3):
    w_key, b_key = jax.random.split(key)
    fan_in = c_in * k * k
    bound = 1.0 / (fan_in ** 0.5)
    w = jax.random.uniform(w_key, (k, k, c_in, c_out), jnp.float32, -bound, bound)  # HWIO
    b = jax.random.uniform(b_key, (c_out,), jnp.float32, -bound, bound)
    return w, b


def _im2col_rows(w_hwio):
    """(3,3,Cin,Cout) HWIO -> (Cout, 9, Cin), tap index t = kh*3 + kw."""
    c_out = w_hwio.shape[-1]
    return jnp.transpose(w_hwio, (3, 0, 1, 2)).reshape(c_out, 9, w_hwio.shape[2])


def make_rbf_unshared_encoder_global_params(key):
    k1, k2, k3, k4 = jax.random.split(key, 4)
    fc_mu = _init_conv_params(k1)
    fc_lv = _init_conv_params(k2)
    fr_mu = _init_conv_params(k3)
    fr_lv = _init_conv_params(k4)

    cin = fc_mu[0].shape[2]
    w_fwd = jnp.concatenate([_im2col_rows(fc_mu[0]), _im2col_rows(fc_lv[0])], axis=0)
    w_rev = jnp.concatenate([_im2col_rows(fr_mu[0]), _im2col_rows(fr_lv[0])], axis=0)
    # Block-diagonal im2col weights; column ordering r = tap*2*Cin + block*Cin + cin.
    w_bd = jnp.zeros((8, 9, 2, cin), jnp.float32)
    w_bd = w_bd.at[0:4, :, 0, :].set(w_fwd)
    w_bd = w_bd.at[4:8, :, 1, :].set(w_rev)
    w_bd = w_bd.reshape(8, 9 * 2 * cin)                                       # (8, 144)
    b_bd = jnp.concatenate([fc_mu[1], fc_lv[1], fr_mu[1], fr_lv[1]])[:, None]  # (8, 1)

    return {
        # Raw per-conv params (kept for reference checking).
        "fc_mu": fc_mu, "fc_log_var": fc_lv,
        "fc_rev_mu": fr_mu, "fc_rev_log_var": fr_lv,
        # Fused block-diagonal weights, precomputed once (not per forward call).
        "w_bd": w_bd, "b_bd": b_bd,
    }


# ---------------------------------------------------------------------------
# Forward pass (matches RBFUnSharedEncoderGlobal.forward; NCHW in / NCHW out)
# ---------------------------------------------------------------------------
@jax.jit
def rbf_unshared_encoder_global(params, m2f, f2m):
    n, cin, height, width = m2f.shape
    p = height * width
    # NCHW -> (N, Cin, H*W): pure reshapes, no transposes, no stacking copy.
    out = _gaussian_pair(m2f.reshape(n, cin, p), f2m.reshape(n, cin, p),
                         params["w_bd"], params["b_bd"], width)
    cout = out.shape[0] // 4                         # 2 output channels per conv

    def unpack(rows):                                # (cout, N*P) -> (N, cout, H, W)
        return rows.reshape(cout, n, height, width).transpose(1, 0, 2, 3)

    mu = unpack(out[0:cout])
    log_var = unpack(out[cout:2 * cout])
    mu_rev = unpack(out[2 * cout:3 * cout])
    log_var_rev = unpack(out[3 * cout:4 * cout])
    return ((mu, log_var), (mu_rev, log_var_rev))


# ---------------------------------------------------------------------------
# Reference + test
# ---------------------------------------------------------------------------
def _reference_conv(x_nchw, w_hwio, b):
    out = jax.lax.conv_general_dilated(
        x_nchw, w_hwio,
        window_strides=(1, 1), padding="SAME",
        dimension_numbers=("NCHW", "HWIO", "NCHW"),
    )
    return out + b.reshape(1, -1, 1, 1)


if __name__ == "__main__":
    key = jax.random.PRNGKey(0)
    pkey, xkey1, xkey2 = jax.random.split(key, 3)

    params = make_rbf_unshared_encoder_global_params(pkey)

    N, C, H, W = 2, 8, 16, 16          # module hard-codes 8 in / 2 out channels
    m2f = jax.random.normal(xkey1, (N, C, H, W), jnp.float32)
    f2m = jax.random.normal(xkey2, (N, C, H, W), jnp.float32)

    ((mu, log_var), (mu_r, log_var_r)) = jax.block_until_ready(
        rbf_unshared_encoder_global(params, m2f, f2m))

    # Correctness check against a pure-JAX conv reference.
    ref_mu = _reference_conv(m2f, *params["fc_mu"])
    ref_lv = _reference_conv(m2f, *params["fc_log_var"])
    ref_mu_r = _reference_conv(f2m, *params["fc_rev_mu"])
    ref_lv_r = _reference_conv(f2m, *params["fc_rev_log_var"])

    assert mu.shape == (N, 2, H, W) and log_var.shape == (N, 2, H, W)
    assert mu_r.shape == (N, 2, H, W) and log_var_r.shape == (N, 2, H, W)
    for got, want in [(mu, ref_mu), (log_var, ref_lv),
                      (mu_r, ref_mu_r), (log_var_r, ref_lv_r)]:
        assert jnp.allclose(got, want, atol=1e-3, rtol=1e-3)

    print("KERNEL_OK")
</pallas_src>

<mosaic_0001>
module attributes {stable_mosaic.version = 11 : i64} {
  func.func @_gaussian_pair_kernel(%arg0: i32, %arg1: memref<2x8x256xf32, #tpu.memory_space<vmem>>, %arg2: memref<2x8x256xf32, #tpu.memory_space<vmem>>, %arg3: memref<8x144xf32, #tpu.memory_space<vmem>>, %arg4: memref<8x1xf32, #tpu.memory_space<vmem>>, %arg5: memref<8x512xf32, #tpu.memory_space<vmem>>, %arg6: memref<16x768xf32, #tpu.memory_space<vmem>>, %arg7: memref<144x512xf32, #tpu.memory_space<vmem>>) attributes {dimension_semantics = [#tpu.dimension_semantics<arbitrary>], iteration_bounds = array<i64: 1>, scalar_prefetch = 0 : i64, scratch_operands = 2 : i64, tpu.core_type = #tpu.core_type<tc>, window_params = [{pipeline_mode = #tpu.pipeline_mode<synchronous>, transform_indices = @transform_0, window_bounds = array<i64: 2, 8, 256>}, {pipeline_mode = #tpu.pipeline_mode<synchronous>, transform_indices = @transform_1, window_bounds = array<i64: 2, 8, 256>}, {pipeline_mode = #tpu.pipeline_mode<synchronous>, transform_indices = @transform_2, window_bounds = array<i64: 8, 144>}, {pipeline_mode = #tpu.pipeline_mode<synchronous>, transform_indices = @transform_3, window_bounds = array<i64: 8, 1>}, {pipeline_mode = #tpu.pipeline_mode<synchronous>, transform_indices = @transform_4, window_bounds = array<i64: 8, 512>}]} {
    %cst = arith.constant 0.000000e+00 : f32
    %0 = vector.broadcast %cst : f32 to vector<16x128xf32>
    %c0 = arith.constant 0 : index
    %c0_0 = arith.constant 0 : index
    %1 = vector.load %arg6[%c0, %c0_0] : memref<16x768xf32, #tpu.memory_space<vmem>>, vector<16x128xf32>
    tpu.vector_store %arg6[%c0, %c0_0], %0 {strides = array<i32>} : memref<16x768xf32, #tpu.memory_space<vmem>>, vector<16x128xf32>,
    %c0_1 = arith.constant 0 : index
    %c640 = arith.constant 640 : index
    %2 = vector.load %arg6[%c0_1, %c640] : memref<16x768xf32, #tpu.memory_space<vmem>>, vector<16x128xf32>
    tpu.vector_store %arg6[%c0_1, %c640], %0 {strides = array<i32>} : memref<16x768xf32, #tpu.memory_space<vmem>>, vector<16x128xf32>,
    %c0_2 = arith.constant 0 : index
    %c0_3 = arith.constant 0 : index
    %c0_4 = arith.constant 0 : index
    %3 = vector.load %arg1[%c0_2, %c0_3, %c0_4] : memref<2x8x256xf32, #tpu.memory_space<vmem>>, vector<1x8x256xf32>
    %4 = vector.shape_cast %3 : vector<1x8x256xf32> to vector<8x256xf32>
    %c0_5 = arith.constant 0 : index
    %c128 = arith.constant 128 : index
    %5 = vector.load %arg6[%c0_5, %c128] : memref<16x768xf32, #tpu.memory_space<vmem>>, vector<8x256xf32>
    tpu.vector_store %arg6[%c0_5, %c128], %4 {strides = array<i32>} : memref<16x768xf32, #tpu.memory_space<vmem>>, vector<8x256xf32>,
    %c0_6 = arith.constant 0 : index
    %c0_7 = arith.constant 0 : index
    %c0_8 = arith.constant 0 : index
    %6 = vector.load %arg2[%c0_6, %c0_7, %c0_8] : memref<2x8x256xf32, #tpu.memory_space<vmem>>, vector<1x8x256xf32>
    %7 = vector.shape_cast %6 : vector<1x8x256xf32> to vector<8x256xf32>
    %c8 = arith.constant 8 : index
    %c128_9 = arith.constant 128 : index
    %8 = vector.load %arg6[%c8, %c128_9] : memref<16x768xf32, #tpu.memory_space<vmem>>, vector<8x256xf32>
    tpu.vector_store %arg6[%c8, %c128_9], %7 {strides = array<i32>} : memref<16x768xf32, #tpu.memory_space<vmem>>, vector<8x256xf32>,
    %c1 = arith.constant 1 : index
    %c0_10 = arith.constant 0 : index
    %c0_11 = arith.constant 0 : index
    %9 = vector.load %arg1[%c1, %c0_10, %c0_11] : memref<2x8x256xf32, #tpu.memory_space<vmem>>, vector<1x8x256xf32>
    %10 = vector.shape_cast %9 : vector<1x8x256xf32> to vector<8x256xf32>
    %c0_12 = arith.constant 0 : index
    %c384 = arith.constant 384 : index
    %11 = vector.load %arg6[%c0_12, %c384] : memref<16x768xf32, #tpu.memory_space<vmem>>, vector<8x256xf32>
    tpu.vector_store %arg6[%c0_12, %c384], %10 {strides = array<i32>} : memref<16x768xf32, #tpu.memory_space<vmem>>, vector<8x256xf32>,
    %c1_13 = arith.constant 1 : index
    %c0_14 = arith.constant 0 : index
    %c0_15 = arith.constant 0 : index
    %12 = vector.load %arg2[%c1_13, %c0_14, %c0_15] : memref<2x8x256xf32, #tpu.memory_space<vmem>>, vector<1x8x256xf32>
    %13 = vector.shape_cast %12 : vector<1x8x256xf32> to vector<8x256xf32>
    %c8_16 = arith.constant 8 : index
    %c384_17 = arith.constant 384 : index
    %14 = vector.load %arg6[%c8_16, %c384_17] : memref<16x768xf32, #tpu.memory_space<vmem>>, vector<8x256xf32>
    tpu.vector_store %arg6[%c8_16, %c384_17], %13 {strides = array<i32>} : memref<16x768xf32, #tpu.memory_space<vmem>>, vector<8x256xf32>,
    %15 = tpu.iota {dimensions = array<i32: 1>} : vector<16x512xi32>
    %c255_i32 = arith.constant 255 : i32
    %16 = vector.broadcast %c255_i32 : i32 to vector<16x512xi32>
    %17 = arith.andi %15, %16 : vector<16x512xi32>
    %c15_i32 = arith.constant 15 : i32
    %18 = vector.broadcast %c15_i32 : i32 to vector<16x512xi32>
    %19 = arith.andi %15, %18 : vector<16x512xi32>
    %c16_i32 = arith.constant 16 : i32
    %20 = vector.broadcast %c16_i32 : i32 to vector<16x512xi32>
    %21 = arith.cmpi sge, %17, %20 : vector<16x512xi32>
    %c240_i32 = arith.constant 240 : i32
    %22 = vector.broadcast %c240_i32 : i32 to vector<16x512xi32>
    %23 = arith.cmpi slt, %17, %22 : vector<16x512xi32>
    %c1_i32 = arith.constant 1 : i32
    %24 = vector.broadcast %c1_i32 : i32 to vector<16x512xi32>
    %25 = arith.cmpi sge, %19, %24 : vector<16x512xi32>
    %c14_i32 = arith.constant 14 : i32
    %26 = vector.broadcast %c14_i32 : i32 to vector<16x512xi32>
    %27 = arith.cmpi sle, %19, %26 : vector<16x512xi32>
    %c0_18 = arith.constant 0 : index
    %c111 = arith.constant 111 : index
    %28 = vector.load %arg6[%c0_18, %c111] : memref<16x768xf32, #tpu.memory_space<vmem>>, vector<16x512xf32>
    %29 = arith.andi %21, %25 : vector<16x512xi1>
    %cst_19 = arith.constant 0.000000e+00 : f32
    %30 = vector.broadcast %cst_19 : f32 to vector<16x512xf32>
    %31 = arith.select %29, %28, %30 : vector<16x512xi1>, vector<16x512xf32>
    %c0_20 = arith.constant 0 : index
    %c0_21 = arith.constant 0 : index
    %32 = vector.load %arg7[%c0_20, %c0_21] : memref<144x512xf32, #tpu.memory_space<vmem>>, vector<16x512xf32>
    tpu.vector_store %arg7[%c0_20, %c0_21], %31 {strides = array<i32>} : memref<144x512xf32, #tpu.memory_space<vmem>>, vector<16x512xf32>,
    %c0_22 = arith.constant 0 : index
    %c112 = arith.constant 112 : index
    %33 = vector.load %arg6[%c0_22, %c112] : memref<16x768xf32, #tpu.memory_space<vmem>>, vector<16x512xf32>
    %cst_23 = arith.constant 0.000000e+00 : f32
    %34 = vector.broadcast %cst_23 : f32 to vector<16x512xf32>
    %35 = arith.select %21, %33, %34 : vector<16x512xi1>, vector<16x512xf32>
    %c16 = arith.constant 16 : index
    %c0_24 = arith.constant 0 : index
    %36 = vector.load %arg7[%c16, %c0_24] : memref<144x512xf32, #tpu.memory_space<vmem>>, vector<16x512xf32>
    tpu.vector_store %arg7[%c16, %c0_24], %35 {strides = array<i32>} : memref<144x512xf32, #tpu.memory_space<vmem>>, vector<16x512xf32>,
    %c0_25 = arith.constant 0 : index
    %c113 = arith.constant 113 : index
    %37 = vector.load %arg6[%c0_25, %c113] : memref<16x768xf32, #tpu.memory_space<vmem>>, vector<16x512xf32>
    %38 = arith.andi %21, %27 : vector<16x512xi1>
    %cst_26 = arith.constant 0.000000e+00 : f32
    %39 = vector.broadcast %cst_26 : f32 to vector<16x512xf32>
    %40 = arith.select %38, %37, %39 : vector<16x512xi1>, vector<16x512xf32>
    %c32 = arith.constant 32 : index
    %c0_27 = arith.constant 0 : index
    %41 = vector.load %arg7[%c32, %c0_27] : memref<144x512xf32, #tpu.memory_space<vmem>>, vector<16x512xf32>
    tpu.vector_store %arg7[%c32, %c0_27], %40 {strides = array<i32>} : memref<144x512xf32, #tpu.memory_space<vmem>>, vector<16x512xf32>,
    %c0_28 = arith.constant 0 : index
    %c127 = arith.constant 127 : index
    %42 = vector.load %arg6[%c0_28, %c127] : memref<16x768xf32, #tpu.memory_space<vmem>>, vector<16x512xf32>
    %cst_29 = arith.constant 0.000000e+00 : f32
    %43 = vector.broadcast %cst_29 : f32 to vector<16x512xf32>
    %44 = arith.select %25, %42, %43 : vector<16x512xi1>, vector<16x512xf32>
    %c48 = arith.constant 48 : index
    %c0_30 = arith.constant 0 : index
    %45 = vector.load %arg7[%c48, %c0_30] : memref<144x512xf32, #tpu.memory_space<vmem>>, vector<16x512xf32>
    tpu.vector_store %arg7[%c48, %c0_30], %44 {strides = array<i32>} : memref<144x512xf32, #tpu.memory_space<vmem>>, vector<16x512xf32>,
    %c0_31 = arith.constant 0 : index
    %c128_32 = arith.constant 128 : index
    %46 = vector.load %arg6[%c0_31, %c128_32] : memref<16x768xf32, #tpu.memory_space<vmem>>, vector<16x512xf32>
    %c64 = arith.constant 64 : index
    %c0_33 = arith.constant 0 : index
    %47 = vector.load %arg7[%c64, %c0_33] : memref<144x512xf32, #tpu.memory_space<vmem>>, vector<16x512xf32>
    tpu.vector_store %arg7[%c64, %c0_33], %46 {strides = array<i32>} : memref<144x512xf32, #tpu.memory_space<vmem>>, vector<16x512xf32>,
    %c0_34 = arith.constant 0 : index
    %c129 = arith.constant 129 : index
    %48 = vector.load %arg6[%c0_34, %c129] : memref<16x768xf32, #tpu.memory_space<vmem>>, vector<16x512xf32>
    %cst_35 = arith.constant 0.000000e+00 : f32
    %49 = vector.broadcast %cst_35 : f32 to vector<16x512xf32>
    %50 = arith.select %27, %48, %49 : vector<16x512xi1>, vector<16x512xf32>
    %c80 = arith.constant 80 : index
    %c0_36 = arith.constant 0 : index
    %51 = vector.load %arg7[%c80, %c0_36] : memref<144x512xf32, #tpu.memory_space<vmem>>, vector<16x512xf32>
    tpu.vector_store %arg7[%c80, %c0_36], %50 {strides = array<i32>} : memref<144x512xf32, #tpu.memory_space<vmem>>, vector<16x512xf32>,
    %c0_37 = arith.constant 0 : index
    %c143 = arith.constant 143 : index
    %52 = vector.load %arg6[%c0_37, %c143] : memref<16x768xf32, #tpu.memory_space<vmem>>, vector<16x512xf32>
    %53 = arith.andi %23, %25 : vector<16x512xi1>
    %cst_38 = arith.constant 0.000000e+00 : f32
    %54 = vector.broadcast %cst_38 : f32 to vector<16x512xf32>
    %55 = arith.select %53, %52, %54 : vector<16x512xi1>, vector<16x512xf32>
    %c96 = arith.constant 96 : index
    %c0_39 = arith.constant 0 : index
    %56 = vector.load %arg7[%c96, %c0_39] : memref<144x512xf32, #tpu.memory_space<vmem>>, vector<16x512xf32>
    tpu.vector_store %arg7[%c96, %c0_39], %55 {strides = array<i32>} : memref<144x512xf32, #tpu.memory_space<vmem>>, vector<16x512xf32>,
    %c0_40 = arith.constant 0 : index
    %c144 = arith.constant 144 : index
    %57 = vector.load %arg6[%c0_40, %c144] : memref<16x768xf32, #tpu.memory_space<vmem>>, vector<16x512xf32>
    %cst_41 = arith.constant 0.000000e+00 : f32
    %58 = vector.broadcast %cst_41 : f32 to vector<16x512xf32>
    %59 = arith.select %23, %57, %58 : vector<16x512xi1>, vector<16x512xf32>
    %c112_42 = arith.constant 112 : index
    %c0_43 = arith.constant 0 : index
    %60 = vector.load %arg7[%c112_42, %c0_43] : memref<144x512xf32, #tpu.memory_space<vmem>>, vector<16x512xf32>
    tpu.vector_store %arg7[%c112_42, %c0_43], %59 {strides = array<i32>} : memref<144x512xf32, #tpu.memory_space<vmem>>, vector<16x512xf32>,
    %c0_44 = arith.constant 0 : index
    %c145 = arith.constant 145 : index
    %61 = vector.load %arg6[%c0_44, %c145] : memref<16x768xf32, #tpu.memory_space<vmem>>, vector<16x512xf32>
    %62 = arith.andi %23, %27 : vector<16x512xi1>
    %cst_45 = arith.constant 0.000000e+00 : f32
    %63 = vector.broadcast %cst_45 : f32 to vector<16x512xf32>
    %64 = arith.select %62, %61, %63 : vector<16x512xi1>, vector<16x512xf32>
    %c128_46 = arith.constant 128 : index
    %c0_47 = arith.constant 0 : index
    %65 = vector.load %arg7[%c128_46, %c0_47] : memref<144x512xf32, #tpu.memory_space<vmem>>, vector<16x512xf32>
    tpu.vector_store %arg7[%c128_46, %c0_47], %64 {strides = array<i32>} : memref<144x512xf32, #tpu.memory_space<vmem>>, vector<16x512xf32>,
    %c0_48 = arith.constant 0 : index
    %c0_49 = arith.constant 0 : index
    %66 = vector.load %arg3[%c0_48, %c0_49] : memref<8x144xf32, #tpu.memory_space<vmem>>, vector<8x144xf32>
    %c0_50 = arith.constant 0 : index
    %c0_51 = arith.constant 0 : index
    %67 = vector.load %arg7[%c0_50, %c0_51] : memref<144x512xf32, #tpu.memory_space<vmem>>, vector<144x512xf32>
    %cst_52 = arith.constant dense<0.000000e+00> : vector<8x512xf32>
    %68 = tpu.matmul %66, %67, %cst_52 {dimension_numbers = #tpu.dot_dimension_numbers<[1], [0], [0], [1], [0, 0, 1, 1], [], []>} : vector<8x144xf32>, vector<144x512xf32>, vector<8x512xf32> -> vector<8x512xf32>
    %c0_53 = arith.constant 0 : index
    %c0_54 = arith.constant 0 : index
    %69 = vector.load %arg4[%c0_53, %c0_54] : memref<8x1xf32, #tpu.memory_space<vmem>>, vector<8x1xf32>
    %70 = vector.broadcast %69 : vector<8x1xf32> to vector<8x512xf32>
    %71 = arith.addf %68, %70 : vector<8x512xf32>
    %c0_55 = arith.constant 0 : index
    %c0_56 = arith.constant 0 : index
    %72 = vector.load %arg5[%c0_55, %c0_56] : memref<8x512xf32, #tpu.memory_space<vmem>>, vector<8x512xf32>
    tpu.vector_store %arg5[%c0_55, %c0_56], %71 {strides = array<i32>} : memref<8x512xf32, #tpu.memory_space<vmem>>, vector<8x512xf32>,
    return
  }
  func.func @transform_0(%arg0: i32) -> (i32, i32, i32) {
    %c0_i32 = arith.constant 0 : i32
    %c0_i32_0 = arith.constant 0 : i32
    %c0_i32_1 = arith.constant 0 : i32
    %c0_i32_2 = arith.constant 0 : i32
    return %c0_i32, %c0_i32_0, %c0_i32_1 : i32, i32, i32
  }
  func.func @transform_1(%arg0: i32) -> (i32, i32, i32) {
    %c0_i32 = arith.constant 0 : i32
    %c0_i32_0 = arith.constant 0 : i32
    %c0_i32_1 = arith.constant 0 : i32
    %c0_i32_2 = arith.constant 0 : i32
    return %c0_i32, %c0_i32_0, %c0_i32_1 : i32, i32, i32
  }
  func.func @transform_2(%arg0: i32) -> (i32, i32) {
    %c0_i32 = arith.constant 0 : i32
    %c0_i32_0 = arith.constant 0 : i32
    %c0_i32_1 = arith.constant 0 : i32
    return %c0_i32, %c0_i32_0 : i32, i32
  }
  func.func @transform_3(%arg0: i32) -> (i32, i32) {
    %c0_i32 = arith.constant 0 : i32
    %c0_i32_0 = arith.constant 0 : i32
    %c0_i32_1 = arith.constant 0 : i32
    return %c0_i32, %c0_i32_0 : i32, i32
  }
  func.func @transform_4(%arg0: i32) -> (i32, i32) {
    %c0_i32 = arith.constant 0 : i32
    %c0_i32_0 = arith.constant 0 : i32
    %c0_i32_1 = arith.constant 0 : i32
    return %c0_i32, %c0_i32_0 : i32, i32
  }
}

</mosaic_0001>

<llo_original>
// kernel: rbf_unshared_encoder_global.1
$region0: #{rbf_unshared_encoder_global.1}
  #allocation0 [shape = 'u32[]', space=smem, size = 0x4, offset = 0x4, fixed_abs, tag = 'smem constant byte address 0x4 - core index']
  #allocation1 [shape = 'u32[144,128]{1,0:T(1,128)}', space=vmem, size = 0x12000, scoped, tag = 'internal scratch']
  #allocation2 [shape = 'f32[16,768]{1,0:T(8,128)}', space=vmem, size = 0xc000, scoped, tag = 'scratch operand']
  #allocation3 [shape = 'f32[144,512]{1,0:T(8,128)}', space=vmem, size = 0x48000, scoped, tag = 'scratch operand']
  %s0 = inlined_call_operand.vmem [shape: f32[2,8,256], index: 0, kind: input, shape index: {}]
  %s1 = inlined_call_operand.vmem [shape: f32[2,8,256], index: 1, kind: input, shape index: {}]
  %s2 = inlined_call_operand.vmem [shape: f32[8,144], index: 2, kind: input, shape index: {}]
  %s3 = inlined_call_operand.vmem [shape: f32[8,1], index: 3, kind: input, shape index: {}]
  %s4 = inlined_call_operand.vmem [shape: f32[8,512], index: 4, kind: output, shape index: {}]
  %s5 = sld [smem:[#allocation0]]
  $region26: #{rbf_unshared_encoder_global.1} parent=0
    _
  %s7 = ssub.s32 1, %s5
  %s8 = scalar_select 0, %s7, %s5
  // Predicated region
  $region2: #{rbf_unshared_encoder_global.1} parent=0 // pred_check
    _
  $region3: #{rbf_unshared_encoder_global.1} parent=0 // pred_check_branch
    %10 = sbr.rel (0) target = $region5
  $region4: #{rbf_unshared_encoder_global.1} parent=0 // pred_region
    _
  $region5: #{rbf_unshared_encoder_global.1} parent=0 // pred_fallthru
    _
  // Predicated region
  $region6: #{rbf_unshared_encoder_global.1} parent=0 // pred_check
    _
  $region7: #{rbf_unshared_encoder_global.1} parent=0 // pred_check_branch
    %12 = sbr.rel (0) target = $region9
  $region8: #{rbf_unshared_encoder_global.1} parent=0 // pred_region
    _
  $region9: #{rbf_unshared_encoder_global.1} parent=0 // pred_fallthru
    _
  // Predicated region
  $region10: #{rbf_unshared_encoder_global.1} parent=0 // pred_check
    _
  $region11: #{rbf_unshared_encoder_global.1} parent=0 // pred_check_branch
    %14 = sbr.rel (0) target = $region13
  $region12: #{rbf_unshared_encoder_global.1} parent=0 // pred_region
    _
  $region13: #{rbf_unshared_encoder_global.1} parent=0 // pred_fallthru
    _
  // Predicated region
  $region14: #{rbf_unshared_encoder_global.1} parent=0 // pred_check
    _
  $region15: #{rbf_unshared_encoder_global.1} parent=0 // pred_check_branch
    %16 = sbr.rel (0) target = $region17
  $region16: #{rbf_unshared_encoder_global.1} parent=0 // pred_region
    _
  $region17: #{rbf_unshared_encoder_global.1} parent=0 // pred_fallthru
    _
  %17 = vst [vmem:[#allocation2] sm:$0xff] 0.0
  %18 = vst [vmem:[#allocation2 + $0x30] sm:$0xff] 0.0
  %19 = vst [vmem:[#allocation2 + $0x28] sm:$0xff] 0.0
  %20 = vst [vmem:[#allocation2 + $0x58] sm:$0xff] 0.0
  %v21 = vld [vmem:[%s0] sm:$0xff]
  %v22 = vld [vmem:[%s0 + $0x8] sm:$0xff]
  %23 = vst [vmem:[#allocation2 + $0x8] sm:$0xff] %v21
  %24 = vst [vmem:[#allocation2 + $0x10] sm:$0xff] %v22
  %v25 = vld [vmem:[%s1] sm:$0xff]
  %v26 = vld [vmem:[%s1 + $0x8] sm:$0xff]
  %27 = vst [vmem:[#allocation2 + $0x38] sm:$0xff] %v25
  %28 = vst [vmem:[#allocation2 + $0x40] sm:$0xff] %v26
  %s29 = scalar_lea.vmem %s0, 16
  %v30 = vld [vmem:[%s29] sm:$0xff]
  %v31 = vld [vmem:[%s29 + $0x8] sm:$0xff]
  %32 = vst [vmem:[#allocation2 + $0x18] sm:$0xff] %v30
  %33 = vst [vmem:[#allocation2 + $0x20] sm:$0xff] %v31
  %s34 = scalar_lea.vmem %s1, 16
  %v35 = vld [vmem:[%s34] sm:$0xff]
  %v36 = vld [vmem:[%s34 + $0x8] sm:$0xff]
  %37 = vst [vmem:[#allocation2 + $0x48] sm:$0xff] %v35
  %38 = vst [vmem:[#allocation2 + $0x50] sm:$0xff] %v36
  %v39 = vlaneseq
  %v40 = vand.u32 %v39, 127
  %v41 = vadd.s32 %v40, 128
  %v42 = vadd.s32 %v40, 256
  %v43 = vadd.s32 %v40, 384
  %v44 = vand.u32 %v40, 255
  %v45 = vand.u32 %v41, 255
  %v46 = vand.u32 %v42, 255
  %v47 = vand.u32 %v43, 255
  %v48 = vand.u32 %v40, 15
  %v49 = vand.u32 %v41, 15
  %v50 = vand.u32 %v42, 15
  %v51 = vand.u32 %v43, 15
  %vm52 = vcmp.ge.s32.totalorder %v44, 16
  %vm53 = vcmp.ge.s32.totalorder %v45, 16
  %vm54 = vcmp.ge.s32.totalorder %v46, 16
  %vm55 = vcmp.ge.s32.totalorder %v47, 16
  %vm56 = vcmp.lt.s32.totalorder %v44, 240
  %vm57 = vcmp.lt.s32.totalorder %v45, 240
  %vm58 = vcmp.lt.s32.totalorder %v46, 240
  %vm59 = vcmp.lt.s32.totalorder %v47, 240
  %vm60 = vcmp.ge.s32.totalorder %v48, 1
  %vm61 = vcmp.ge.s32.totalorder %v49, 1
  %vm62 = vcmp.ge.s32.totalorder %v50, 1
  %vm63 = vcmp.ge.s32.totalorder %v51, 1
  %vm64 = vcmp.le.s32.totalorder %v48, 14
  %vm65 = vcmp.le.s32.totalorder %v49, 14
  %vm66 = vcmp.le.s32.totalorder %v50, 14
  %vm67 = vcmp.le.s32.totalorder %v51, 14
  %v68 = vld [vmem:[#allocation2] sm:$0xff]
  %v69 = vld [vmem:[#allocation2 + $0x8] sm:$0xff]
  %v70 = vld [vmem:[#allocation2 + $0x10] sm:$0xff]
  %v71 = vld [vmem:[#allocation2 + $0x18] sm:$0xff]
  %v72 = vld [vmem:[#allocation2 + $0x20] sm:$0xff]
  %v73 = vld [vmem:[#allocation2 + $0x30] sm:$0xff]
  %v74 = vld [vmem:[#allocation2 + $0x38] sm:$0xff]
  %v75 = vld [vmem:[#allocation2 + $0x40] sm:$0xff]
  %v76 = vld [vmem:[#allocation2 + $0x48] sm:$0xff]
  %v77 = vld [vmem:[#allocation2 + $0x50] sm:$0xff]
  %vm78 = vmand %vm52, %vm60
  %vm79 = vmand %vm53, %vm61
  %vm80 = vmand %vm54, %vm62
  %vm81 = vmand %vm55, %vm63
  %92 = vrot.lane.b32.xlu0 %v68, 17
  %v93 = vpop.permute.xlu0 %92
  %94 = vrot.lane.b32.xlu0 %v69, 17
  %v95 = vpop.permute.xlu0 %94
  %96 = vrot.lane.b32.xlu0 %v70, 17
  %v97 = vpop.permute.xlu0 %96
  %98 = vrot.lane.b32.xlu0 %v71, 17
  %v99 = vpop.permute.xlu0 %98
  %100 = vrot.lane.b32.xlu0 %v72, 17
  %v101 = vpop.permute.xlu0 %100
  %102 = vrot.lane.b32.xlu0 %v73, 17
  %v103 = vpop.permute.xlu0 %102
  %104 = vrot.lane.b32.xlu0 %v74, 17
  %v105 = vpop.permute.xlu0 %104
  %106 = vrot.lane.b32.xlu0 %v75, 17
  %v107 = vpop.permute.xlu0 %106
  %108 = vrot.lane.b32.xlu0 %v76, 17
  %v109 = vpop.permute.xlu0 %108
  %110 = vrot.lane.b32.xlu0 %v77, 17
  %v111 = vpop.permute.xlu0 %110
  %vm112 = vcmask 138240
  %v113 = vsel %vm112, %v93, %v95
  %v114 = vsel %vm112, %v95, %v97
  %v115 = vsel %vm112, %v97, %v99
  %v116 = vsel %vm112, %v99, %v101
  %v117 = vsel %vm112, %v103, %v105
  %v118 = vsel %vm112, %v105, %v107
  %v119 = vsel %vm112, %v107, %v109
  %v120 = vsel %vm112, %v109, %v111
  %v129 = vsel %vm78, %v113, 0.0
  %v130 = vsel %vm79, %v114, 0.0
  %v131 = vsel %vm80, %v115, 0.0
  %v132 = vsel %vm81, %v116, 0.0
  %v133 = vsel %vm78, %v117, 0.0
  %v134 = vsel %vm79, %v118, 0.0
  %v135 = vsel %vm80, %v119, 0.0
  %v136 = vsel %vm81, %v120, 0.0
  %137 = vst [vmem:[#allocation3] sm:$0xff] %v129
  %138 = vst [vmem:[#allocation3 + $0x8] sm:$0xff] %v130
  %139 = vst [vmem:[#allocation3 + $0x10] sm:$0xff] %v131
  %140 = vst [vmem:[#allocation3 + $0x18] sm:$0xff] %v132
  %141 = vst [vmem:[#allocation3 + $0x20] sm:$0xff] %v133
  %142 = vst [vmem:[#allocation3 + $0x28] sm:$0xff] %v134
  %143 = vst [vmem:[#allocation3 + $0x30] sm:$0xff] %v135
  %144 = vst [vmem:[#allocation3 + $0x38] sm:$0xff] %v136
  %v145 = vld [vmem:[#allocation2] sm:$0xff]
  %v146 = vld [vmem:[#allocation2 + $0x8] sm:$0xff]
  %v147 = vld [vmem:[#allocation2 + $0x10] sm:$0xff]
  %v148 = vld [vmem:[#allocation2 + $0x18] sm:$0xff]
  %v149 = vld [vmem:[#allocation2 + $0x20] sm:$0xff]
  %v150 = vld [vmem:[#allocation2 + $0x30] sm:$0xff]
  %v151 = vld [vmem:[#allocation2 + $0x38] sm:$0xff]
  %v152 = vld [vmem:[#allocation2 + $0x40] sm:$0xff]
  %v153 = vld [vmem:[#allocation2 + $0x48] sm:$0xff]
  %v154 = vld [vmem:[#allocation2 + $0x50] sm:$0xff]
  %165 = vrot.lane.b32.xlu0 %v145, 16
  %v166 = vpop.permute.xlu0 %165
  %167 = vrot.lane.b32.xlu0 %v146, 16
  %v168 = vpop.permute.xlu0 %167
  %169 = vrot.lane.b32.xlu0 %v147, 16
  %v170 = vpop.permute.xlu0 %169
  %171 = vrot.lane.b32.xlu0 %v148, 16
  %v172 = vpop.permute.xlu0 %171
  %173 = vrot.lane.b32.xlu0 %v149, 16
  %v174 = vpop.permute.xlu0 %173
  %175 = vrot.lane.b32.xlu0 %v150, 16
  %v176 = vpop.permute.xlu0 %175
  %177 = vrot.lane.b32.xlu0 %v151, 16
  %v178 = vpop.permute.xlu0 %177
  %179 = vrot.lane.b32.xlu0 %v152, 16
  %v180 = vpop.permute.xlu0 %179
  %181 = vrot.lane.b32.xlu0 %v153, 16
  %v182 = vpop.permute.xlu0 %181
  %183 = vrot.lane.b32.xlu0 %v154, 16
  %v184 = vpop.permute.xlu0 %183
  %vm185 = vcmask 130048
  %v186 = vsel %vm185, %v166, %v168
  %v187 = vsel %vm185, %v168, %v170
  %v188 = vsel %vm185, %v170, %v172
  %v189 = vsel %vm185, %v172, %v174
  %v190 = vsel %vm185, %v176, %v178
  %v191 = vsel %vm185, %v178, %v180
  %v192 = vsel %vm185, %v180, %v182
  %v193 = vsel %vm185, %v182, %v184
  %v202 = vsel %vm52, %v186, 0.0
  %v203 = vsel %vm53, %v187, 0.0
  %v204 = vsel %vm54, %v188, 0.0
  %v205 = vsel %vm55, %v189, 0.0
  %v206 = vsel %vm52, %v190, 0.0
  %v207 = vsel %vm53, %v191, 0.0
  %v208 = vsel %vm54, %v192, 0.0
  %v209 = vsel %vm55, %v193, 0.0
  %210 = vst [vmem:[#allocation3 + $0x40] sm:$0xff] %v202
  %211 = vst [vmem:[#allocation3 + $0x48] sm:$0xff] %v203
  %212 = vst [vmem:[#allocation3 + $0x50] sm:$0xff] %v204
  %213 = vst [vmem:[#allocation3 + $0x58] sm:$0xff] %v205
  %214 = vst [vmem:[#allocation3 + $0x60] sm:$0xff] %v206
  %215 = vst [vmem:[#allocation3 + $0x68] sm:$0xff] %v207
  %216 = vst [vmem:[#allocation3 + $0x70] sm:$0xff] %v208
  %217 = vst [vmem:[#allocation3 + $0x78] sm:$0xff] %v209
  %v218 = vld [vmem:[#allocation2] sm:$0xff]
  %v219 = vld [vmem:[#allocation2 + $0x8] sm:$0xff]
  %v220 = vld [vmem:[#allocation2 + $0x10] sm:$0xff]
  %v221 = vld [vmem:[#allocation2 + $0x18] sm:$0xff]
  %v222 = vld [vmem:[#allocation2 + $0x20] sm:$0xff]
  %v223 = vld [vmem:[#allocation2 + $0x30] sm:$0xff]
  %v224 = vld [vmem:[#allocation2 + $0x38] sm:$0xff]
  %v225 = vld [vmem:[#allocation2 + $0x40] sm:$0xff]
  %v226 = vld [vmem:[#allocation2 + $0x48] sm:$0xff]
  %v227 = vld [vmem:[#allocation2 + $0x50] sm:$0xff]
  %vm228 = vmand %vm52, %vm64
  %vm229 = vmand %vm53, %vm65
  %vm230 = vmand %vm54, %vm66
  %vm231 = vmand %vm55, %vm67
  %242 = vrot.lane.b32.xlu0 %v218, 15
  %v243 = vpop.permute.xlu0 %242
  %244 = vrot.lane.b32.xlu0 %v219, 15
  %v245 = vpop.permute.xlu0 %244
  %246 = vrot.lane.b32.xlu0 %v220, 15
  %v247 = vpop.permute.xlu0 %246
  %248 = vrot.lane.b32.xlu0 %v221, 15
  %v249 = vpop.permute.xlu0 %248
  %250 = vrot.lane.b32.xlu0 %v222, 15
  %v251 = vpop.permute.xlu0 %250
  %252 = vrot.lane.b32.xlu0 %v223, 15
  %v253 = vpop.permute.xlu0 %252
  %254 = vrot.lane.b32.xlu0 %v224, 15
  %v255 = vpop.permute.xlu0 %254
  %256 = vrot.lane.b32.xlu0 %v225, 15
  %v257 = vpop.permute.xlu0 %256
  %258 = vrot.lane.b32.xlu0 %v226, 15
  %v259 = vpop.permute.xlu0 %258
  %260 = vrot.lane.b32.xlu0 %v227, 15
  %v261 = vpop.permute.xlu0 %260
  %vm262 = vcmask 121856
  %v263 = vsel %vm262, %v243, %v245
  %v264 = vsel %vm262, %v245, %v247
  %v265 = vsel %vm262, %v247, %v249
  %v266 = vsel %vm262, %v249, %v251
  %v267 = vsel %vm262, %v253, %v255
  %v268 = vsel %vm262, %v255, %v257
  %v269 = vsel %vm262, %v257, %v259
  %v270 = vsel %vm262, %v259, %v261
  %v279 = vsel %vm228, %v263, 0.0
  %v280 = vsel %vm229, %v264, 0.0
  %v281 = vsel %vm230, %v265, 0.0
  %v282 = vsel %vm231, %v266, 0.0
  %v283 = vsel %vm228, %v267, 0.0
  %v284 = vsel %vm229, %v268, 0.0
  %v285 = vsel %vm230, %v269, 0.0
  %v286 = vsel %vm231, %v270, 0.0
  %287 = vst [vmem:[#allocation3 + $0x80] sm:$0xff] %v279
  %288 = vst [vmem:[#allocation3 + $0x88] sm:$0xff] %v280
  %289 = vst [vmem:[#allocation3 + $0x90] sm:$0xff] %v281
  %290 = vst [vmem:[#allocation3 + $0x98] sm:$0xff] %v282
  %291 = vst [vmem:[#allocation3 + $0xa0] sm:$0xff] %v283
  %292 = vst [vmem:[#allocation3 + $0xa8] sm:$0xff] %v284
  %293 = vst [vmem:[#allocation3 + $0xb0] sm:$0xff] %v285
  %294 = vst [vmem:[#allocation3 + $0xb8] sm:$0xff] %v286
  %v295 = vld [vmem:[#allocation2] sm:$0xff]
  %v296 = vld [vmem:[#allocation2 + $0x8] sm:$0xff]
  %v297 = vld [vmem:[#allocation2 + $0x10] sm:$0xff]
  %v298 = vld [vmem:[#allocation2 + $0x18] sm:$0xff]
  %v299 = vld [vmem:[#allocation2 + $0x20] sm:$0xff]
  %v300 = vld [vmem:[#allocation2 + $0x30] sm:$0xff]
  %v301 = vld [vmem:[#allocation2 + $0x38] sm:$0xff]
  %v302 = vld [vmem:[#allocation2 + $0x40] sm:$0xff]
  %v303 = vld [vmem:[#allocation2 + $0x48] sm:$0xff]
  %v304 = vld [vmem:[#allocation2 + $0x50] sm:$0xff]
  %315 = vrot.lane.b32.xlu0 %v295, 1
  %v316 = vpop.permute.xlu0 %315
  %317 = vrot.lane.b32.xlu0 %v296, 1
  %v318 = vpop.permute.xlu0 %317
  %319 = vrot.lane.b32.xlu0 %v297, 1
  %v320 = vpop.permute.xlu0 %319
  %321 = vrot.lane.b32.xlu0 %v298, 1
  %v322 = vpop.permute.xlu0 %321
  %323 = vrot.lane.b32.xlu0 %v299, 1
  %v324 = vpop.permute.xlu0 %323
  %325 = vrot.lane.b32.xlu0 %v300, 1
  %v326 = vpop.permute.xlu0 %325
  %327 = vrot.lane.b32.xlu0 %v301, 1
  %v328 = vpop.permute.xlu0 %327
  %329 = vrot.lane.b32.xlu0 %v302, 1
  %v330 = vpop.permute.xlu0 %329
  %331 = vrot.lane.b32.xlu0 %v303, 1
  %v332 = vpop.permute.xlu0 %331
  %333 = vrot.lane.b32.xlu0 %v304, 1
  %v334 = vpop.permute.xlu0 %333
  %vm335 = vcmask 7168
  %v336 = vsel %vm335, %v316, %v318
  %v337 = vsel %vm335, %v318, %v320
  %v338 = vsel %vm335, %v320, %v322
  %v339 = vsel %vm335, %v322, %v324
  %v340 = vsel %vm335, %v326, %v328
  %v341 = vsel %vm335, %v328, %v330
  %v342 = vsel %vm335, %v330, %v332
  %v343 = vsel %vm335, %v332, %v334
  %v352 = vsel %vm60, %v336, 0.0
  %v353 = vsel %vm61, %v337, 0.0
  %v354 = vsel %vm62, %v338, 0.0
  %v355 = vsel %vm63, %v339, 0.0
  %v356 = vsel %vm60, %v340, 0.0
  %v357 = vsel %vm61, %v341, 0.0
  %v358 = vsel %vm62, %v342, 0.0
  %v359 = vsel %vm63, %v343, 0.0
  %360 = vst [vmem:[#allocation3 + $0xc0] sm:$0xff] %v352
  %361 = vst [vmem:[#allocation3 + $0xc8] sm:$0xff] %v353
  %362 = vst [vmem:[#allocation3 + $0xd0] sm:$0xff] %v354
  %363 = vst [vmem:[#allocation3 + $0xd8] sm:$0xff] %v355
  %364 = vst [vmem:[#allocation3 + $0xe0] sm:$0xff] %v356
  %365 = vst [vmem:[#allocation3 + $0xe8] sm:$0xff] %v357
  %366 = vst [vmem:[#allocation3 + $0xf0] sm:$0xff] %v358
  %367 = vst [vmem:[#allocation3 + $0xf8] sm:$0xff] %v359
  %v368 = vld [vmem:[#allocation2 + $0x8] sm:$0xff]
  %v369 = vld [vmem:[#allocation2 + $0x10] sm:$0xff]
  %v370 = vld [vmem:[#allocation2 + $0x18] sm:$0xff]
  %v371 = vld [vmem:[#allocation2 + $0x20] sm:$0xff]
  %v372 = vld [vmem:[#allocation2 + $0x38] sm:$0xff]
  %v373 = vld [vmem:[#allocation2 + $0x40] sm:$0xff]
  %v374 = vld [vmem:[#allocation2 + $0x48] sm:$0xff]
  %v375 = vld [vmem:[#allocation2 + $0x50] sm:$0xff]
  %376 = vst [vmem:[#allocation3 + $0x100] sm:$0xff] %v368
  %377 = vst [vmem:[#allocation3 + $0x108] sm:$0xff] %v369
  %378 = vst [vmem:[#allocation3 + $0x110] sm:$0xff] %v370
  %379 = vst [vmem:[#allocation3 + $0x118] sm:$0xff] %v371
  %380 = vst [vmem:[#allocation3 + $0x120] sm:$0xff] %v372
  %381 = vst [vmem:[#allocation3 + $0x128] sm:$0xff] %v373
  %382 = vst [vmem:[#allocation3 + $0x130] sm:$0xff] %v374
  %383 = vst [vmem:[#allocation3 + $0x138] sm:$0xff] %v375
  %v384 = vld [vmem:[#allocation2 + $0x8] sm:$0xff]
  %v385 = vld [vmem:[#allocation2 + $0x10] sm:$0xff]
  %v386 = vld [vmem:[#allocation2 + $0x18] sm:$0xff]
  %v387 = vld [vmem:[#allocation2 + $0x20] sm:$0xff]
  %v388 = vld [vmem:[#allocation2 + $0x28] sm:$0xff]
  %v389 = vld [vmem:[#allocation2 + $0x38] sm:$0xff]
  %v390 = vld [vmem:[#allocation2 + $0x40] sm:$0xff]
  %v391 = vld [vmem:[#allocation2 + $0x48] sm:$0xff]
  %v392 = vld [vmem:[#allocation2 + $0x50] sm:$0xff]
  %v393 = vld [vmem:[#allocation2 + $0x58] sm:$0xff]
  %404 = vrot.lane.b32.xlu0 %v384, 127
  %v405 = vpop.permute.xlu0 %404
  %406 = vrot.lane.b32.xlu0 %v385, 127
  %v407 = vpop.permute.xlu0 %406
  %408 = vrot.lane.b32.xlu0 %v386, 127
  %v409 = vpop.permute.xlu0 %408
  %410 = vrot.lane.b32.xlu0 %v387, 127
  %v411 = vpop.permute.xlu0 %410
  %412 = vrot.lane.b32.xlu0 %v388, 127
  %v413 = vpop.permute.xlu0 %412
  %414 = vrot.lane.b32.xlu0 %v389, 127
  %v415 = vpop.permute.xlu0 %414
  %416 = vrot.lane.b32.xlu0 %v390, 127
  %v417 = vpop.permute.xlu0 %416
  %418 = vrot.lane.b32.xlu0 %v391, 127
  %v419 = vpop.permute.xlu0 %418
  %420 = vrot.lane.b32.xlu0 %v392, 127
  %v421 = vpop.permute.xlu0 %420
  %422 = vrot.lane.b32.xlu0 %v393, 127
  %v423 = vpop.permute.xlu0 %422
  %vm424 = vcmask 1039360
  %v425 = vsel %vm424, %v405, %v407
  %v426 = vsel %vm424, %v407, %v409
  %v427 = vsel %vm424, %v409, %v411
  %v428 = vsel %vm424, %v411, %v413
  %v429 = vsel %vm424, %v415, %v417
  %v430 = vsel %vm424, %v417, %v419
  %v431 = vsel %vm424, %v419, %v421
  %v432 = vsel %vm424, %v421, %v423
  %v441 = vsel %vm64, %v425, 0.0
  %v442 = vsel %vm65, %v426, 0.0
  %v443 = vsel %vm66, %v427, 0.0
  %v444 = vsel %vm67, %v428, 0.0
  %v445 = vsel %vm64, %v429, 0.0
  %v446 = vsel %vm65, %v430, 0.0
  %v447 = vsel %vm66, %v431, 0.0
  %v448 = vsel %vm67, %v432, 0.0
  %449 = vst [vmem:[#allocation3 + $0x140] sm:$0xff] %v441
  %450 = vst [vmem:[#allocation3 + $0x148] sm:$0xff] %v442
  %451 = vst [vmem:[#allocation3 + $0x150] sm:$0xff] %v443
  %452 = vst [vmem:[#allocation3 + $0x158] sm:$0xff] %v444
  %453 = vst [vmem:[#allocation3 + $0x160] sm:$0xff] %v445
  %454 = vst [vmem:[#allocation3 + $0x168] sm:$0xff] %v446
  %455 = vst [vmem:[#allocation3 + $0x170] sm:$0xff] %v447
  %456 = vst [vmem:[#allocation3 + $0x178] sm:$0xff] %v448
  %v457 = vld [vmem:[#allocation2 + $0x8] sm:$0xff]
  %v458 = vld [vmem:[#allocation2 + $0x10] sm:$0xff]
  %v459 = vld [vmem:[#allocation2 + $0x18] sm:$0xff]
  %v460 = vld [vmem:[#allocation2 + $0x20] sm:$0xff]
  %v461 = vld [vmem:[#allocation2 + $0x28] sm:$0xff]
  %v462 = vld [vmem:[#allocation2 + $0x38] sm:$0xff]
  %v463 = vld [vmem:[#allocation2 + $0x40] sm:$0xff]
  %v464 = vld [vmem:[#allocation2 + $0x48] sm:$0xff]
  %v465 = vld [vmem:[#allocation2 + $0x50] sm:$0xff]
  %v466 = vld [vmem:[#allocation2 + $0x58] sm:$0xff]
  %vm467 = vmand %vm56, %vm60
  %vm468 = vmand %vm57, %vm61
  %vm469 = vmand %vm58, %vm62
  %vm470 = vmand %vm59, %vm63
  %481 = vrot.lane.b32.xlu0 %v457, 113
  %v482 = vpop.permute.xlu0 %481
  %483 = vrot.lane.b32.xlu0 %v458, 113
  %v484 = vpop.permute.xlu0 %483
  %485 = vrot.lane.b32.xlu0 %v459, 113
  %v486 = vpop.permute.xlu0 %485
  %487 = vrot.lane.b32.xlu0 %v460, 113
  %v488 = vpop.permute.xlu0 %487
  %489 = vrot.lane.b32.xlu0 %v461, 113
  %v490 = vpop.permute.xlu0 %489
  %491 = vrot.lane.b32.xlu0 %v462, 113
  %v492 = vpop.permute.xlu0 %491
  %493 = vrot.lane.b32.xlu0 %v463, 113
  %v494 = vpop.permute.xlu0 %493
  %495 = vrot.lane.b32.xlu0 %v464, 113
  %v496 = vpop.permute.xlu0 %495
  %497 = vrot.lane.b32.xlu0 %v465, 113
  %v498 = vpop.permute.xlu0 %497
  %499 = vrot.lane.b32.xlu0 %v466, 113
  %v500 = vpop.permute.xlu0 %499
  %vm501 = vcmask 924672
  %v502 = vsel %vm501, %v482, %v484
  %v503 = vsel %vm501, %v484, %v486
  %v504 = vsel %vm501, %v486, %v488
  %v505 = vsel %vm501, %v488, %v490
  %v506 = vsel %vm501, %v492, %v494
  %v507 = vsel %vm501, %v494, %v496
  %v508 = vsel %vm501, %v496, %v498
  %v509 = vsel %vm501, %v498, %v500
  %v518 = vsel %vm467, %v502, 0.0
  %v519 = vsel %vm468, %v503, 0.0
  %v520 = vsel %vm469, %v504, 0.0
  %v521 = vsel %vm470, %v505, 0.0
  %v522 = vsel %vm467, %v506, 0.0
  %v523 = vsel %vm468, %v507, 0.0
  %v524 = vsel %vm469, %v508, 0.0
  %v525 = vsel %vm470, %v509, 0.0
  %526 = vst [vmem:[#allocation3 + $0x180] sm:$0xff] %v518
  %527 = vst [vmem:[#allocation3 + $0x188] sm:$0xff] %v519
  %528 = vst [vmem:[#allocation3 + $0x190] sm:$0xff] %v520
  %529 = vst [vmem:[#allocation3 + $0x198] sm:$0xff] %v521
  %530 = vst [vmem:[#allocation3 + $0x1a0] sm:$0xff] %v522
  %531 = vst [vmem:[#allocation3 + $0x1a8] sm:$0xff] %v523
  %532 = vst [vmem:[#allocation3 + $0x1b0] sm:$0xff] %v524
  %533 = vst [vmem:[#allocation3 + $0x1b8] sm:$0xff] %v525
  %v534 = vld [vmem:[#allocation2 + $0x8] sm:$0xff]
  %v535 = vld [vmem:[#allocation2 + $0x10] sm:$0xff]
  %v536 = vld [vmem:[#allocation2 + $0x18] sm:$0xff]
  %v537 = vld [vmem:[#allocation2 + $0x20] sm:$0xff]
  %v538 = vld [vmem:[#allocation2 + $0x28] sm:$0xff]
  %v539 = vld [vmem:[#allocation2 + $0x38] sm:$0xff]
  %v540 = vld [vmem:[#allocation2 + $0x40] sm:$0xff]
  %v541 = vld [vmem:[#allocation2 + $0x48] sm:$0xff]
  %v542 = vld [vmem:[#allocation2 + $0x50] sm:$0xff]
  %v543 = vld [vmem:[#allocation2 + $0x58] sm:$0xff]
  %554 = vrot.lane.b32.xlu0 %v534, 112
  %v555 = vpop.permute.xlu0 %554
  %556 = vrot.lane.b32.xlu0 %v535, 112
  %v557 = vpop.permute.xlu0 %556
  %558 = vrot.lane.b32.xlu0 %v536, 112
  %v559 = vpop.permute.xlu0 %558
  %560 = vrot.lane.b32.xlu0 %v537, 112
  %v561 = vpop.permute.xlu0 %560
  %562 = vrot.lane.b32.xlu0 %v538, 112
  %v563 = vpop.permute.xlu0 %562
  %564 = vrot.lane.b32.xlu0 %v539, 112
  %v565 = vpop.permute.xlu0 %564
  %566 = vrot.lane.b32.xlu0 %v540, 112
  %v567 = vpop.permute.xlu0 %566
  %568 = vrot.lane.b32.xlu0 %v541, 112
  %v569 = vpop.permute.xlu0 %568
  %570 = vrot.lane.b32.xlu0 %v542, 112
  %v571 = vpop.permute.xlu0 %570
  %572 = vrot.lane.b32.xlu0 %v543, 112
  %v573 = vpop.permute.xlu0 %572
  %vm574 = vcmask 916480
  %v575 = vsel %vm574, %v555, %v557
  %v576 = vsel %vm574, %v557, %v559
  %v577 = vsel %vm574, %v559, %v561
  %v578 = vsel %vm574, %v561, %v563
  %v579 = vsel %vm574, %v565, %v567
  %v580 = vsel %vm574, %v567, %v569
  %v581 = vsel %vm574, %v569, %v571
  %v582 = vsel %vm574, %v571, %v573
  %v591 = vsel %vm56, %v575, 0.0
  %v592 = vsel %vm57, %v576, 0.0
  %v593 = vsel %vm58, %v577, 0.0
  %v594 = vsel %vm59, %v578, 0.0
  %v595 = vsel %vm56, %v579, 0.0
  %v596 = vsel %vm57, %v580, 0.0
  %v597 = vsel %vm58, %v581, 0.0
  %v598 = vsel %vm59, %v582, 0.0
  %599 = vst [vmem:[#allocation3 + $0x1c0] sm:$0xff] %v591
  %600 = vst [vmem:[#allocation3 + $0x1c8] sm:$0xff] %v592
  %601 = vst [vmem:[#allocation3 + $0x1d0] sm:$0xff] %v593
  %602 = vst [vmem:[#allocation3 + $0x1d8] sm:$0xff] %v594
  %603 = vst [vmem:[#allocation3 + $0x1e0] sm:$0xff] %v595
  %604 = vst [vmem:[#allocation3 + $0x1e8] sm:$0xff] %v596
  %605 = vst [vmem:[#allocation3 + $0x1f0] sm:$0xff] %v597
  %606 = vst [vmem:[#allocation3 + $0x1f8] sm:$0xff] %v598
  %v607 = vld [vmem:[#allocation2 + $0x8] sm:$0xff]
  %v608 = vld [vmem:[#allocation2 + $0x10] sm:$0xff]
  %v609 = vld [vmem:[#allocation2 + $0x18] sm:$0xff]
  %v610 = vld [vmem:[#allocation2 + $0x20] sm:$0xff]
  %v611 = vld [vmem:[#allocation2 + $0x28] sm:$0xff]
  %v612 = vld [vmem:[#allocation2 + $0x38] sm:$0xff]
  %v613 = vld [vmem:[#allocation2 + $0x40] sm:$0xff]
  %v614 = vld [vmem:[#allocation2 + $0x48] sm:$0xff]
  %v615 = vld [vmem:[#allocation2 + $0x50] sm:$0xff]
  %v616 = vld [vmem:[#allocation2 + $0x58] sm:$0xff]
  %vm617 = vmand %vm56, %vm64
  %vm618 = vmand %vm57, %vm65
  %vm619 = vmand %vm58, %vm66
  %vm620 = vmand %vm59, %vm67
  %631 = vrot.lane.b32.xlu0 %v607, 111
  %v632 = vpop.permute.xlu0 %631
  %633 = vrot.lane.b32.xlu0 %v608, 111
  %v634 = vpop.permute.xlu0 %633
  %635 = vrot.lane.b32.xlu0 %v609, 111
  %v636 = vpop.permute.xlu0 %635
  %637 = vrot.lane.b32.xlu0 %v610, 111
  %v638 = vpop.permute.xlu0 %637
  %639 = vrot.lane.b32.xlu0 %v611, 111
  %v640 = vpop.permute.xlu0 %639
  %641 = vrot.lane.b32.xlu0 %v612, 111
  %v642 = vpop.permute.xlu0 %641
  %643 = vrot.lane.b32.xlu0 %v613, 111
  %v644 = vpop.permute.xlu0 %643
  %645 = vrot.lane.b32.xlu0 %v614, 111
  %v646 = vpop.permute.xlu0 %645
  %647 = vrot.lane.b32.xlu0 %v615, 111
  %v648 = vpop.permute.xlu0 %647
  %649 = vrot.lane.b32.xlu0 %v616, 111
  %v650 = vpop.permute.xlu0 %649
  %vm651 = vcmask 908288
  %v652 = vsel %vm651, %v632, %v634
  %v653 = vsel %vm651, %v634, %v636
  %v654 = vsel %vm651, %v636, %v638
  %v655 = vsel %vm651, %v638, %v640
  %v656 = vsel %vm651, %v642, %v644
  %v657 = vsel %vm651, %v644, %v646
  %v658 = vsel %vm651, %v646, %v648
  %v659 = vsel %vm651, %v648, %v650
  %v668 = vsel %vm617, %v652, 0.0
  %v669 = vsel %vm618, %v653, 0.0
  %v670 = vsel %vm619, %v654, 0.0
  %v671 = vsel %vm620, %v655, 0.0
  %v672 = vsel %vm617, %v656, 0.0
  %v673 = vsel %vm618, %v657, 0.0
  %v674 = vsel %vm619, %v658, 0.0
  %v675 = vsel %vm620, %v659, 0.0
  %676 = vst [vmem:[#allocation3 + $0x200] sm:$0xff] %v668
  %677 = vst [vmem:[#allocation3 + $0x208] sm:$0xff] %v669
  %678 = vst [vmem:[#allocation3 + $0x210] sm:$0xff] %v670
  %679 = vst [vmem:[#allocation3 + $0x218] sm:$0xff] %v671
  %680 = vst [vmem:[#allocation3 + $0x220] sm:$0xff] %v672
  %681 = vst [vmem:[#allocation3 + $0x228] sm:$0xff] %v673
  %682 = vst [vmem:[#allocation3 + $0x230] sm:$0xff] %v674
  %683 = vst [vmem:[#allocation3 + $0x238] sm:$0xff] %v675
  %v684 = vld [vmem:[%s2] sm:$0xff]
  %v685 = vld [vmem:[%s2 + $0x8] sm:$0xff]
  %v686 = vld [vmem:[#allocation3] sm:$0xff]
  %v687 = vld [vmem:[#allocation3 + $0x8] sm:$0xff]
  %v688 = vld [vmem:[#allocation3 + $0x10] sm:$0xff]
  %v689 = vld [vmem:[#allocation3 + $0x18] sm:$0xff]
  %v690 = vld [vmem:[#allocation3 + $0x20] sm:$0xff]
  %v691 = vld [vmem:[#allocation3 + $0x28] sm:$0xff]
  %v692 = vld [vmem:[#allocation3 + $0x30] sm:$0xff]
  %v693 = vld [vmem:[#allocation3 + $0x38] sm:$0xff]
  %v694 = vld [vmem:[#allocation3 + $0x40] sm:$0xff]
  %v695 = vld [vmem:[#allocation3 + $0x48] sm:$0xff]
  %v696 = vld [vmem:[#allocation3 + $0x50] sm:$0xff]
  %v697 = vld [vmem:[#allocation3 + $0x58] sm:$0xff]
  %v698 = vld [vmem:[#allocation3 + $0x60] sm:$0xff]
  %v699 = vld [vmem:[#allocation3 + $0x68] sm:$0xff]
  %v700 = vld [vmem:[#allocation3 + $0x70] sm:$0xff]
  %v701 = vld [vmem:[#allocation3 + $0x78] sm:$0xff]
  %v702 = vld [vmem:[#allocation3 + $0x80] sm:$0xff]
  %v703 = vld [vmem:[#allocation3 + $0x88] sm:$0xff]
  %v704 = vld [vmem:[#allocation3 + $0x90] sm:$0xff]
  %v705 = vld [vmem:[#allocation3 + $0x98] sm:$0xff]
  %v706 = vld [vmem:[#allocation3 + $0xa0] sm:$0xff]
  %v707 = vld [vmem:[#allocation3 + $0xa8] sm:$0xff]
  %v708 = vld [vmem:[#allocation3 + $0xb0] sm:$0xff]
  %v709 = vld [vmem:[#allocation3 + $0xb8] sm:$0xff]
  %v710 = vld [vmem:[#allocation3 + $0xc0] sm:$0xff]
  %v711 = vld [vmem:[#allocation3 + $0xc8] sm:$0xff]
  %v712 = vld [vmem:[#allocation3 + $0xd0] sm:$0xff]
  %v713 = vld [vmem:[#allocation3 + $0xd8] sm:$0xff]
  %v714 = vld [vmem:[#allocation3 + $0xe0] sm:$0xff]
  %v715 = vld [vmem:[#allocation3 + $0xe8] sm:$0xff]
  %v716 = vld [vmem:[#allocation3 + $0xf0] sm:$0xff]
  %v717 = vld [vmem:[#allocation3 + $0xf8] sm:$0xff]
  %v718 = vld [vmem:[#allocation3 + $0x100] sm:$0xff]
  %v719 = vld [vmem:[#allocation3 + $0x108] sm:$0xff]
  %v720 = vld [vmem:[#allocation3 + $0x110] sm:$0xff]
  %v721 = vld [vmem:[#allocation3 + $0x118] sm:$0xff]
  %v722 = vld [vmem:[#allocation3 + $0x120] sm:$0xff]
  %v723 = vld [vmem:[#allocation3 + $0x128] sm:$0xff]
  %v724 = vld [vmem:[#allocation3 + $0x130] sm:$0xff]
  %v725 = vld [vmem:[#allocation3 + $0x138] sm:$0xff]
  %v726 = vld [vmem:[#allocation3 + $0x140] sm:$0xff]
  %v727 = vld [vmem:[#allocation3 + $0x148] sm:$0xff]
  %v728 = vld [vmem:[#allocation3 + $0x150] sm:$0xff]
  %v729 = vld [vmem:[#allocation3 + $0x158] sm:$0xff]
  %v730 = vld [vmem:[#allocation3 + $0x160] sm:$0xff]
  %v731 = vld [vmem:[#allocation3 + $0x168] sm:$0xff]
  %v732 = vld [vmem:[#allocation3 + $0x170] sm:$0xff]
  %v733 = vld [vmem:[#allocation3 + $0x178] sm:$0xff]
  %v734 = vld [vmem:[#allocation3 + $0x180] sm:$0xff]
  %v735 = vld [vmem:[#allocation3 + $0x188] sm:$0xff]
  %v736 = vld [vmem:[#allocation3 + $0x190] sm:$0xff]
  %v737 = vld [vmem:[#allocation3 + $0x198] sm:$0xff]
  %v738 = vld [vmem:[#allocation3 + $0x1a0] sm:$0xff]
  %v739 = vld [vmem:[#allocation3 + $0x1a8] sm:$0xff]
  %v740 = vld [vmem:[#allocation3 + $0x1b0] sm:$0xff]
  %v741 = vld [vmem:[#allocation3 + $0x1b8] sm:$0xff]
  %v742 = vld [vmem:[#allocation3 + $0x1c0] sm:$0xff]
  %v743 = vld [vmem:[#allocation3 + $0x1c8] sm:$0xff]
  %v744 = vld [vmem:[#allocation3 + $0x1d0] sm:$0xff]
  %v745 = vld [vmem:[#allocation3 + $0x1d8] sm:$0xff]
  %v746 = vld [vmem:[#allocation3 + $0x1e0] sm:$0xff]
  %v747 = vld [vmem:[#allocation3 + $0x1e8] sm:$0xff]
  %v748 = vld [vmem:[#allocation3 + $0x1f0] sm:$0xff]
  %v749 = vld [vmem:[#allocation3 + $0x1f8] sm:$0xff]
  %v750 = vld [vmem:[#allocation3 + $0x200] sm:$0xff]
  %v751 = vld [vmem:[#allocation3 + $0x208] sm:$0xff]
  %v752 = vld [vmem:[#allocation3 + $0x210] sm:$0xff]
  %v753 = vld [vmem:[#allocation3 + $0x218] sm:$0xff]
  %v754 = vld [vmem:[#allocation3 + $0x220] sm:$0xff]
  %v755 = vld [vmem:[#allocation3 + $0x228] sm:$0xff]
  %v756 = vld [vmem:[#allocation3 + $0x230] sm:$0xff]
  %v757 = vld [vmem:[#allocation3 + $0x238] sm:$0xff]
  %v758 = vld [vmem:[%s3] sm:$0xff]
  %760 = vset.pattern.permute.xlu0 0
  %761 = vperm.xlu0 %760, %v758
  %v762 = vpop.permute.xlu0 %761
  %v765 = vsel %vm185, %v685, 0
  %767 = vmatprep.subr.mxu0 %v687
  %768 = vmatpush1.msra.mxu0 %v686
  %769 = vmatprep.subr.mxu0 %v691
  %770 = vmatpush1.msra.mxu0 %v690
  %771 = vmatprep.subr.mxu0 %v695
  %772 = vmatpush1.msra.mxu0 %v694
  %773 = vmatprep.subr.mxu0 %v699
  %774 = vmatpush1.msra.mxu0 %v698
  %775 = vmatprep.subr.mxu0 %v703
  %776 = vmatpush1.msra.mxu0 %v702
  %777 = vmatprep.subr.mxu0 %v707
  %778 = vmatpush1.msra.mxu0 %v706
  %779 = vmatprep.subr.mxu0 %v711
  %780 = vmatpush1.msra.mxu0 %v710
  %781 = vmatprep.subr.mxu0 %v715
  %782 = vmatpush1.msra.mxu0 %v714
  %783 = vmatprep.subr.mxu0 %v719
  %784 = vmatpush1.msra.mxu0 %v718
  %785 = vmatprep.subr.mxu0 %v723
  %786 = vmatpush1.msra.mxu0 %v722
  %787 = vmatprep.subr.mxu0 %v727
  %788 = vmatpush1.msra.mxu0 %v726
  %789 = vmatprep.subr.mxu0 %v731
  %790 = vmatpush1.msra.mxu0 %v730
  %791 = vmatprep.subr.mxu0 %v735
  %792 = vmatpush1.msra.mxu0 %v734
  %793 = vmatprep.subr.mxu0 %v739
  %794 = vmatpush1.msra.mxu0 %v738
  %795 = vmatprep.subr.mxu0 %v743
  %796 = vmatpush1.msra.mxu0 %v742
  %797 = vmatprep.subr.mxu0 %v747
  %798 = vmatpush1.msra.mxu0 %v746
  %799 = vmatprep.subr.mxu0 %v751
  %800 = vmatpush1.msra.mxu0 %v750
  %801 = vmatprep.subr.mxu0 %v755
  %802 = vmatpush1.msra.mxu0 %v754
  %803 = vmatprep.subr.mxu0 0.0
  %804 = vmatpush1.msra.mxu0 0.0
  %805 = vmatprep.subr.mxu0 0.0
  %806 = vmatpush1.msra.mxu0 0.0
  %807 = vmatprep.subr.mxu0 0.0
  %808 = vmatpush1.msra.mxu0 0.0
  %809 = vmatprep.subr.mxu0 0.0
  %810 = vmatpush1.msra.mxu0 0.0
  %811 = vmatprep.subr.mxu0 0.0
  %812 = vmatpush1.msra.mxu0 0.0
  %813 = vmatprep.subr.mxu0 0.0
  %814 = vmatpush1.msra.mxu0 0.0
  %815 = vmatprep.subr.mxu0 0.0
  %816 = vmatpush1.msra.mxu0 0.0
  %817 = vmatprep.subr.mxu0 0.0
  %818 = vmatpush1.msra.mxu0 0.0
  %819 = vmatprep.subr.mxu0 0.0
  %820 = vmatpush1.msra.mxu0 0.0
  %821 = vmatprep.subr.mxu0 0.0
  %822 = vmatpush1.msra.mxu0 0.0
  %823 = vmatprep.subr.mxu0 0.0
  %824 = vmatpush1.msra.mxu0 0.0
  %825 = vmatprep.subr.mxu0 0.0
  %826 = vmatpush1.msra.mxu0 0.0
  %827 = vmatprep.subr.mxu0 0.0
  %828 = vmatpush1.msra.mxu0 0.0
  %829 = vmatprep.subr.mxu0 0.0
  %830 = vmatpush1.msra.mxu0 0.0
  %831 = vmatprep.mubr.f32.mxu0 %v765
  %832 = vmatmul.mubr.f32.gmra.mrb[0].mxu0 %v684
  %v833 = vpop.f32.mrb[0].mxu0
  %v834 = vadd.f32 %v762, %v833
  %v835 = vpop.f32.mrb[0].mxu0
  %v836 = vadd.f32 %v762, %v835
  %837 = vdwg.mxu0
  %838 = vmatprep.subr.mxu0 %v689
  %839 = vmatpush1.msra.mxu0 %v688
  %840 = vmatprep.subr.mxu0 %v693
  %841 = vmatpush1.msra.mxu0 %v692
  %842 = vmatprep.subr.mxu0 %v697
  %843 = vmatpush1.msra.mxu0 %v696
  %844 = vmatprep.subr.mxu0 %v701
  %845 = vmatpush1.msra.mxu0 %v700
  %846 = vmatprep.subr.mxu0 %v705
  %847 = vmatpush1.msra.mxu0 %v704
  %848 = vmatprep.subr.mxu0 %v709
  %849 = vmatpush1.msra.mxu0 %v708
  %850 = vmatprep.subr.mxu0 %v713
  %851 = vmatpush1.msra.mxu0 %v712
  %852 = vmatprep.subr.mxu0 %v717
  %853 = vmatpush1.msra.mxu0 %v716
  %854 = vmatprep.subr.mxu0 %v721
  %855 = vmatpush1.msra.mxu0 %v720
  %856 = vmatprep.subr.mxu0 %v725
  %857 = vmatpush1.msra.mxu0 %v724
  %858 = vmatprep.subr.mxu0 %v729
  %859 = vmatpush1.msra.mxu0 %v728
  %860 = vmatprep.subr.mxu0 %v733
  %861 = vmatpush1.msra.mxu0 %v732
  %862 = vmatprep.subr.mxu0 %v737
  %863 = vmatpush1.msra.mxu0 %v736
  %864 = vmatprep.subr.mxu0 %v741
  %865 = vmatpush1.msra.mxu0 %v740
  %866 = vmatprep.subr.mxu0 %v745
  %867 = vmatpush1.msra.mxu0 %v744
  %868 = vmatprep.subr.mxu0 %v749
  %869 = vmatpush1.msra.mxu0 %v748
  %870 = vmatprep.subr.mxu0 %v753
  %871 = vmatpush1.msra.mxu0 %v752
  %872 = vmatprep.subr.mxu0 %v757
  %873 = vmatpush1.msra.mxu0 %v756
  %874 = vmatprep.subr.mxu0 0.0
  %875 = vmatpush1.msra.mxu0 0.0
  %876 = vmatprep.subr.mxu0 0.0
  %877 = vmatpush1.msra.mxu0 0.0
  %878 = vmatprep.subr.mxu0 0.0
  %879 = vmatpush1.msra.mxu0 0.0
  %880 = vmatprep.subr.mxu0 0.0
  %881 = vmatpush1.msra.mxu0 0.0
  %882 = vmatprep.subr.mxu0 0.0
  %883 = vmatpush1.msra.mxu0 0.0
  %884 = vmatprep.subr.mxu0 0.0
  %885 = vmatpush1.msra.mxu0 0.0
  %886 = vmatprep.subr.mxu0 0.0
  %887 = vmatpush1.msra.mxu0 0.0
  %888 = vmatprep.subr.mxu0 0.0
  %889 = vmatpush1.msra.mxu0 0.0
  %890 = vmatprep.subr.mxu0 0.0
  %891 = vmatpush1.msra.mxu0 0.0
  %892 = vmatprep.subr.mxu0 0.0
  %893 = vmatpush1.msra.mxu0 0.0
  %894 = vmatprep.subr.mxu0 0.0
  %895 = vmatpush1.msra.mxu0 0.0
  %896 = vmatprep.subr.mxu0 0.0
  %897 = vmatpush1.msra.mxu0 0.0
  %898 = vmatprep.subr.mxu0 0.0
  %899 = vmatpush1.msra.mxu0 0.0
  %900 = vmatprep.subr.mxu0 0.0
  %901 = vmatpush1.msra.mxu0 0.0
  %902 = vmatprep.mubr.f32.mxu0 %v765
  %903 = vmatmul.mubr.f32.gmra.mrb[0].mxu0 %v684
  %v904 = vpop.f32.mrb[0].mxu0
  %v905 = vadd.f32 %v762, %v904
  %v906 = vpop.f32.mrb[0].mxu0
  %v907 = vadd.f32 %v762, %v906
  %908 = vdwg.mxu0
  %909 = vst [vmem:[%s4] sm:$0xff] %v834
  %910 = vst [vmem:[%s4 + $0x8] sm:$0xff] %v836
  %911 = vst [vmem:[%s4 + $0x10] sm:$0xff] %v905
  %912 = vst [vmem:[%s4 + $0x18] sm:$0xff] %v907
  // Predicated region
  $region18: #{rbf_unshared_encoder_global.1} parent=0 // pred_check
    _
  $region19: #{rbf_unshared_encoder_global.1} parent=0 // pred_check_branch
    %914 = sbr.rel (0) target = $region21
  $region20: #{rbf_unshared_encoder_global.1} parent=0 // pred_region
    _
  $region21: #{rbf_unshared_encoder_global.1} parent=0 // pred_fallthru
    _
  // Predicated region
  $region22: #{rbf_unshared_encoder_global.1} parent=0 // pred_check
    _
  $region23: #{rbf_unshared_encoder_global.1} parent=0 // pred_check_branch
    %916 = sbr.rel (0) target = $region25
  $region24: #{rbf_unshared_encoder_global.1} parent=0 // pred_region
    _
  $region25: #{rbf_unshared_encoder_global.1} parent=0 // pred_fallthru
    _

</llo_original>
